<compile_context>
chip_gen: v7x
topology: tpu7x:2x2x1
jax: 0.10.0
libtpu: 0.0.40
codegen_flags: <defaults>
</compile_context>

<pallas_src>
import functools

import jax
import jax.numpy as jnp
from jax.experimental import pallas as pl
from jax.experimental.pallas import tpu as pltpu


_NEG = -1e30   # masks pad lanes out of the softmax (exp -> 0); avoids inf-inf NaNs
_KP = 128      # lane-dense class width (last dim of lp / bias / output tiles)


def _right_net_kernel(*refs, use_left):
    """One batch tile: fused R-way linear (bf16 hi/lo split) + log-bias + softmax."""
    if use_left:
        x_ref, whi_ref, wlo_ref, lp_ref, bias_ref, p_ref = refs
    else:
        x_ref, whi_ref, wlo_ref, bias_ref, p_ref = refs
        lp_ref = None

    x = x_ref[...]
    # Two bf16 MXU passes reconstruct the f32 weight slab to ~2^-18 relative error
    # (one-hot x is exact in bf16), giving f32-level fidelity to the PyTorch Linear.
    logits = jnp.dot(x, whi_ref[...], preferred_element_type=jnp.float32)
    logits = logits + jnp.dot(x, wlo_ref[...], preferred_element_type=jnp.float32)
    logits = logits + bias_ref[...]            # log(prior) on real lanes, -1e30 on pads
    if use_left:
        logits = logits + lp_ref[...]          # log(left_p + 0.001), precomputed in wrapper

    # numerically-stable softmax over the padded 128-lane class axis, all in f32
    m = jnp.max(logits, axis=-1, keepdims=True)
    e = jnp.exp(logits - m)
    inv = 1.0 / jnp.sum(e, axis=-1, keepdims=True)   # exact: divisor is only (block_b, 1)
    p_ref[...] = e * inv


def _round_up(x, m):
    return ((x + m - 1) // m) * m


def _pick_block_b(n, requested=None):
    """Large batch tiles (up to 1024 rows) amortize per-step overhead; keep >= 2 grid
    steps when n allows so v7x's two TensorCores both get work."""
    if requested is not None:
        return max(8, _round_up(requested, 8))
    bb = min(_round_up(max(n, 1), 8), 1024)
    if n >= 16:
        bb = min(bb, _round_up(pl.cdiv(n, 2), 8))
    return bb


def right_net_forward(x, weights, prior, left_p=None, type=0, block_b=None):
    """
    x:       (n, R, K) one-hot annotations
    weights: (R, K, K) nn.Linear weights (out, in) = log(confusion_init + 1e-4)
    prior:   (1, K) class prior (self.priority)
    left_p:  (n, K) left-net probabilities (required for type 1/3)
    type:    0/1/2/3 -- static config selecting which log terms are added
    Returns: (n, K) class probabilities.
    """
    n, R, K = x.shape
    RK = R * K
    use_left = type in (1, 3)
    if use_left and left_p is None:
        raise ValueError("left_p is required for type in (1, 3)")

    bb = _pick_block_b(n, block_b)
    n_blocks = pl.cdiv(n, bb)
    n_pad = n_blocks * bb

    # ---- wrapper-side layout plumbing (keeps all reshapes out of the kernel) ----
    # sum_r x[:, r, :] @ W_r.T == x.reshape(n, R*K) @ W.transpose(0, 2, 1).reshape(R*K, K)
    x2d = x.reshape(n, RK).astype(jnp.bfloat16)
    if n_pad == n:
        x_flat = x2d                                      # no extra zero-pad pass over x
    else:
        x_flat = jnp.zeros((n_pad, RK), jnp.bfloat16).at[:n].set(x2d)

    w_flat = jnp.transpose(weights.astype(jnp.float32), (0, 2, 1)).reshape(RK, K)
    w_full = jnp.zeros((RK, _KP), jnp.float32).at[:, :K].set(w_flat)
    w_hi = w_full.astype(jnp.bfloat16)                    # bf16 hi/lo split of f32 weights
    w_lo = (w_full - w_hi.astype(jnp.float32)).astype(jnp.bfloat16)

    # bias row: log(prior) on real lanes (types 1/2), -1e30 on the 128-K pad lanes.
    real = jnp.zeros((1, K), jnp.float32)
    if type in (1, 2):
        real = real + jnp.log(prior.reshape(1, K).astype(jnp.float32))
    bias = jnp.full((1, _KP), _NEG, dtype=jnp.float32).at[:, :K].set(real)

    inputs = [x_flat, w_hi, w_lo]
    in_specs = [
        pl.BlockSpec((bb, RK), lambda i: (i, 0)),         # batch-tiled activations
        pl.BlockSpec((RK, _KP), lambda i: (0, 0)),        # VMEM-resident weights (hi)
        pl.BlockSpec((RK, _KP), lambda i: (0, 0)),        # VMEM-resident weights (lo)
    ]
    if use_left:
        # log(left_p + 0.001) hoisted into the padding pass (fuses into one XLA op);
        # pad rows / pad lanes are 0, which is benign (-1e30 bias still masks pads).
        lp_pad = jnp.zeros((n_pad, _KP), jnp.float32).at[:n, :K].set(
            jnp.log(left_p.astype(jnp.float32) + 0.001))
        inputs.append(lp_pad)
        in_specs.append(pl.BlockSpec((bb, _KP), lambda i: (i, 0)))
    inputs.append(bias)
    in_specs.append(pl.BlockSpec((1, _KP), lambda i: (0, 0)))   # VMEM-resident bias row

    flops = 2 * 2 * n_pad * RK * _KP + 4 * n_pad * _KP
    transcendentals = n_pad * _KP
    bytes_accessed = (x_flat.size * 2 + (w_hi.size + w_lo.size) * 2 + bias.size * 4
                      + (n_pad * _KP * 4 if use_left else 0) + n_pad * _KP * 4)

    p_pad = pl.pallas_call(
        functools.partial(_right_net_kernel, use_left=use_left),
        out_shape=jax.ShapeDtypeStruct((n_pad, _KP), jnp.float32),
        grid=(n_blocks,),
        in_specs=in_specs,
        out_specs=pl.BlockSpec((bb, _KP), lambda i: (i, 0)),
        compiler_params=pltpu.CompilerParams(
            dimension_semantics=("parallel",)),
        cost_estimate=pl.CostEstimate(flops=flops,
                                      transcendentals=transcendentals,
                                      bytes_accessed=bytes_accessed),
    )(*inputs)
    return p_pad[:n, :K]


def _reference(x, weights, prior, left_p, type):
    # Honest f32 reference (no bf16 casts): full-precision einsum + f32 softmax.
    out = jnp.einsum('nrk,rjk->nj', x.astype(jnp.float32), weights.astype(jnp.float32),
                     precision=jax.lax.Precision.HIGHEST)   # sum_r x[:, r, :] @ W_r.T
    if type == 1:
        out = out + jnp.log(left_p + 0.001) + jnp.log(prior)
    elif type == 2:
        out = out + jnp.log(prior)
    elif type == 3:
        out = out + jnp.log(left_p + 0.001)
    return jax.nn.softmax(out, axis=1)


if __name__ == "__main__":
    # Small shapes consistent with the module: n samples, R annotators, K classes.
    n, R, K = 200, 4, 8            # block_b picker -> 104-row tiles, 2 grid steps
    key = jax.random.PRNGKey(0)
    k_lbl, k_conf, k_lp = jax.random.split(key, 3)

    labels = jax.random.randint(k_lbl, (n, R), 0, K)
    x = jax.nn.one_hot(labels, K, dtype=jnp.float32)              # (n, R, K) one-hot

    # Row-stochastic confusion matrices; weights_init: W_r = log(confusion_init[r] + 1e-4)
    conf = jax.nn.softmax(
        jax.random.normal(k_conf, (R, K, K), dtype=jnp.float32) + 2.0 * jnp.eye(K),
        axis=-1)
    weights = jnp.log(conf + 1e-4)                                 # (R, K, K)

    prior = jnp.full((1, K), 1.0 / K, dtype=jnp.float32)           # self.priority
    left_p = jax.nn.softmax(
        jax.random.normal(k_lp, (n, K), dtype=jnp.float32), axis=-1)

    outs = {}
    for t in (0, 1, 2, 3):
        outs[t] = right_net_forward(x, weights, prior, left_p=left_p, type=t)
    jax.block_until_ready(outs)

    for t, p in outs.items():
        p_ref = _reference(x, weights, prior, left_p, t)
        assert p.shape == (n, K), f"shape mismatch for type={t}"
        assert jnp.allclose(p, p_ref, atol=1e-3, rtol=1e-3), f"mismatch for type={t}"
        assert jnp.allclose(jnp.sum(p, axis=-1), 1.0, atol=1e-5), \
            f"rows not normalized (type={t})"

    print("KERNEL_OK")
</pallas_src>

<mosaic_0001>
module attributes {stable_mosaic.version = 11 : i64} {
  func.func @_right_net_kernel(%arg0: i32, %arg1: memref<104x32xbf16, #tpu.memory_space<vmem>>, %arg2: memref<32x128xbf16, #tpu.memory_space<vmem>>, %arg3: memref<32x128xbf16, #tpu.memory_space<vmem>>, %arg4: memref<1x128xf32, #tpu.memory_space<vmem>>, %arg5: memref<104x128xf32, #tpu.memory_space<vmem>>) attributes {dimension_semantics = [#tpu.dimension_semantics<parallel>], iteration_bounds = array<i64: 2>, scalar_prefetch = 0 : i64, scratch_operands = 0 : i64, tpu.core_type = #tpu.core_type<tc>, window_params = [{transform_indices = @transform_0, window_bounds = array<i64: 104, 32>}, {pipeline_mode = #tpu.pipeline_mode<synchronous>, transform_indices = @transform_1, window_bounds = array<i64: 32, 128>}, {pipeline_mode = #tpu.pipeline_mode<synchronous>, transform_indices = @transform_2, window_bounds = array<i64: 32, 128>}, {pipeline_mode = #tpu.pipeline_mode<synchronous>, transform_indices = @transform_3, window_bounds = array<i64: 1, 128>}, {transform_indices = @transform_4, window_bounds = array<i64: 104, 128>}]} {
    %c0 = arith.constant 0 : index
    %c0_0 = arith.constant 0 : index
    %0 = vector.load %arg1[%c0, %c0_0] : memref<104x32xbf16, #tpu.memory_space<vmem>>, vector<104x32xbf16>
    %c0_1 = arith.constant 0 : index
    %c0_2 = arith.constant 0 : index
    %1 = vector.load %arg2[%c0_1, %c0_2] : memref<32x128xbf16, #tpu.memory_space<vmem>>, vector<32x128xbf16>
    %cst = arith.constant dense<0.000000e+00> : vector<104x128xf32>
    %2 = tpu.matmul %0, %1, %cst {dimension_numbers = #tpu.dot_dimension_numbers<[1], [0], [0], [1], [0, 0, 1, 1], [], []>} : vector<104x32xbf16>, vector<32x128xbf16>, vector<104x128xf32> -> vector<104x128xf32>
    %c0_3 = arith.constant 0 : index
    %c0_4 = arith.constant 0 : index
    %3 = vector.load %arg3[%c0_3, %c0_4] : memref<32x128xbf16, #tpu.memory_space<vmem>>, vector<32x128xbf16>
    %cst_5 = arith.constant dense<0.000000e+00> : vector<104x128xf32>
    %4 = tpu.matmul %0, %3, %cst_5 {dimension_numbers = #tpu.dot_dimension_numbers<[1], [0], [0], [1], [0, 0, 1, 1], [], []>} : vector<104x32xbf16>, vector<32x128xbf16>, vector<104x128xf32> -> vector<104x128xf32>
    %5 = arith.addf %2, %4 : vector<104x128xf32>
    %c0_6 = arith.constant 0 : index
    %c0_7 = arith.constant 0 : index
    %6 = vector.load %arg4[%c0_6, %c0_7] : memref<1x128xf32, #tpu.memory_space<vmem>>, vector<1x128xf32>
    %7 = vector.broadcast %6 : vector<1x128xf32> to vector<104x128xf32>
    %8 = arith.addf %5, %7 : vector<104x128xf32>
    %cst_8 = arith.constant dense<0xFF800000> : vector<104xf32>
    %9 = vector.multi_reduction <maximumf>, %8, %cst_8 [1] : vector<104x128xf32> to vector<104xf32>
    %10 = vector.shape_cast %9 : vector<104xf32> to vector<104x1xf32>
    %11 = vector.broadcast %10 : vector<104x1xf32> to vector<104x128xf32>
    %12 = arith.subf %8, %11 : vector<104x128xf32>
    %13 = math.exp %12 : vector<104x128xf32>
    %cst_9 = arith.constant dense<0.000000e+00> : vector<104xf32>
    %14 = vector.multi_reduction <add>, %13, %cst_9 [1] : vector<104x128xf32> to vector<104xf32>
    %15 = vector.shape_cast %14 : vector<104xf32> to vector<104x1xf32>
    %cst_10 = arith.constant 1.000000e+00 : f32
    %16 = vector.broadcast %cst_10 : f32 to vector<104x1xf32>
    %17 = arith.divf %16, %15 : vector<104x1xf32>
    %18 = vector.broadcast %17 : vector<104x1xf32> to vector<104x128xf32>
    %19 = arith.mulf %13, %18 : vector<104x128xf32>
    %c0_11 = arith.constant 0 : index
    %c0_12 = arith.constant 0 : index
    %20 = vector.load %arg5[%c0_11, %c0_12] : memref<104x128xf32, #tpu.memory_space<vmem>>, vector<104x128xf32>
    tpu.vector_store %arg5[%c0_11, %c0_12], %19 {strides = array<i32>} : memref<104x128xf32, #tpu.memory_space<vmem>>, vector<104x128xf32>,
    return
  }
  func.func @transform_0(%arg0: i32) -> (i32, i32) {
    %c0_i32 = arith.constant 0 : i32
    %c0_i32_0 = arith.constant 0 : i32
    return %arg0, %c0_i32 : i32, i32
  }
  func.func @transform_1(%arg0: i32) -> (i32, i32) {
    %c0_i32 = arith.constant 0 : i32
    %c0_i32_0 = arith.constant 0 : i32
    %c0_i32_1 = arith.constant 0 : i32
    return %c0_i32, %c0_i32_0 : i32, i32
  }
  func.func @transform_2(%arg0: i32) -> (i32, i32) {
    %c0_i32 = arith.constant 0 : i32
    %c0_i32_0 = arith.constant 0 : i32
    %c0_i32_1 = arith.constant 0 : i32
    return %c0_i32, %c0_i32_0 : i32, i32
  }
  func.func @transform_3(%arg0: i32) -> (i32, i32) {
    %c0_i32 = arith.constant 0 : i32
    %c0_i32_0 = arith.constant 0 : i32
    %c0_i32_1 = arith.constant 0 : i32
    return %c0_i32, %c0_i32_0 : i32, i32
  }
  func.func @transform_4(%arg0: i32) -> (i32, i32) {
    %c0_i32 = arith.constant 0 : i32
    %c0_i32_0 = arith.constant 0 : i32
    return %arg0, %c0_i32 : i32, i32
  }
}

</mosaic_0001>

<llo_original>
// kernel: tpu_custom_call.1
$region0: #{tpu_custom_call.1}
  #allocation0 [shape = 'u32[]', space=smem, size = 0x4, offset = 0x4, fixed_abs, tag = 'smem constant byte address 0x4 - core index']
  #allocation1 [shape = 'u32[144,128]{1,0:T(1,128)}', space=vmem, size = 0x12000, scoped, tag = 'internal scratch']
  %s0 = inlined_call_operand.vmem [shape: bf16[208,32], index: 0, kind: input, shape index: {}]
  %s1 = inlined_call_operand.vmem [shape: bf16[32,128], index: 1, kind: input, shape index: {}]
  %s2 = inlined_call_operand.vmem [shape: bf16[32,128], index: 2, kind: input, shape index: {}]
  %s3 = inlined_call_operand.vmem [shape: f32[1,128], index: 3, kind: input, shape index: {}]
  %s4 = inlined_call_operand.hbm [shape: f32[208,128], index: 4, kind: output, shape index: {}]
  %s5 = sld [smem:[#allocation0]]
  $region49: #{tpu_custom_call.1} parent=0
    _
  %s7 = ssub.s32 1, %s5
  %s8 = scalar_select 0, %s7, %s5
  $region1: #{tpu_custom_call.1} parent=0
    #allocation2 [shape = 'u8[106496]{0}', space=vmem, size = 0x1a000, scoped, tag = 'output window, operand 0']
    #allocation3 [shape = 's32[2]{0}', space=sflag, size = 0x8, scoped, tag = 'scoped memory for tpu_custom_call.1']
    %9 = vsyncpa [#allocation3], 0
    %s10 = scalar_lea.sflag [#allocation3], 1
    %11 = vsyncpa %s10, 0
    loop: start=0, step=1, limit=4
    $region2: #{tpu_custom_call.1} parent=1 // loop_pre_header
      _
    $region3: #{tpu_custom_call.1} parent=1 // loop_header
      %s13 = sphi 0, %s17
      %p14 = scmp.ge.s32.totalorder %s13, 4
      %s23 = sphi 0, %s25
      %s26 = sphi 0, %s23
      %s27 = sphi 0, %s26
      %s43 = sphi 0, %s27
      %s47 = sphi 0, %s47
      %s49 = sphi 0, %s47
      %s50 = sphi 0, %s49
      %s64 = sphi 0, %s50
      %s68 = sphi 0, %s68
      %s70 = sphi 0, %s68
      %s71 = sphi 0, %s70
      %s85 = sphi 0, %s71
      %s89 = sphi 0, %s89
      %s91 = sphi 0, %s89
      %s92 = sphi 0, %s91
      %s106 = sphi 0, %s92
      %s112 = sphi 0, %s114
      %s115 = sphi 0, %s112
      %s116 = sphi 0, %s115
      %s132 = sphi 0, %s116
    $region4: #{tpu_custom_call.1} parent=1 // loop_header_branch
      %16 = sbr.rel (%p14) target = $region8
    $region5: #{tpu_custom_call.1} parent=1 // loop_body
      %s18 = ssub.s32 %s13, 1
      %s19 = ssub.s32 %s13, 2
      %s20 = sadd.s32 %s13, 1
      %s21 = ssub.s32 %s13, %s20
      %p22 = scmp.eq.s32.totalorder %s21, 0
      %s24 = sadd.s32 %s23, 1
      %s25 = scalar_select %p22, %s23, %s24
      %p28 = pneg %p22
      %p29 = scmp.eq.s32.totalorder %s13, 1
      %p30 = por %p28, %p29
      %p31 = scmp.ne.s32.totalorder %s23, %s26
      %p32 = scmp.eq.s32.totalorder %s13, 0
      %p33 = por %p31, %p32
      %p34 = scmp.ne.s32.totalorder %s23, %s26
      %p35 = scmp.eq.s32.totalorder %s18, 1
      %p36 = por %p34, %p35
      %p37 = scmp.ne.s32.totalorder %s26, %s27
      %p38 = scmp.eq.s32.totalorder %s18, 0
      %p39 = por %p37, %p38
      %p40 = scmp.ne.s32.totalorder %s26, %s27
      %p41 = scmp.eq.s32.totalorder %s19, 1
      %p42 = por %p40, %p41
      %p44 = scmp.ne.s32.totalorder %s27, %s43
      %p45 = scmp.eq.s32.totalorder %s19, 0
      %p46 = por %p44, %p45
      %s48 = sadd.s32 %s47, 1
      %p51 = scmp.eq.s32.totalorder %s13, 1
      %p52 = scmp.ne.s32.totalorder %s47, %s49
      %p53 = scmp.eq.s32.totalorder %s13, 0
      %p54 = por %p52, %p53
      %p55 = scmp.ne.s32.totalorder %s47, %s49
      %p56 = scmp.eq.s32.totalorder %s18, 1
      %p57 = por %p55, %p56
      %p58 = scmp.ne.s32.totalorder %s49, %s50
      %p59 = scmp.eq.s32.totalorder %s18, 0
      %p60 = por %p58, %p59
      %p61 = scmp.ne.s32.totalorder %s49, %s50
      %p62 = scmp.eq.s32.totalorder %s19, 1
      %p63 = por %p61, %p62
      %p65 = scmp.ne.s32.totalorder %s50, %s64
      %p66 = scmp.eq.s32.totalorder %s19, 0
      %p67 = por %p65, %p66
      %s69 = sadd.s32 %s68, 1
      %p72 = scmp.eq.s32.totalorder %s13, 1
      %p73 = scmp.ne.s32.totalorder %s68, %s70
      %p74 = scmp.eq.s32.totalorder %s13, 0
      %p75 = por %p73, %p74
      %p76 = scmp.ne.s32.totalorder %s68, %s70
      %p77 = scmp.eq.s32.totalorder %s18, 1
      %p78 = por %p76, %p77
      %p79 = scmp.ne.s32.totalorder %s70, %s71
      %p80 = scmp.eq.s32.totalorder %s18, 0
      %p81 = por %p79, %p80
      %p82 = scmp.ne.s32.totalorder %s70, %s71
      %p83 = scmp.eq.s32.totalorder %s19, 1
      %p84 = por %p82, %p83
      %p86 = scmp.ne.s32.totalorder %s71, %s85
      %p87 = scmp.eq.s32.totalorder %s19, 0
      %p88 = por %p86, %p87
      %s90 = sadd.s32 %s89, 1
      %p93 = scmp.eq.s32.totalorder %s13, 1
      %p94 = scmp.ne.s32.totalorder %s89, %s91
      %p95 = scmp.eq.s32.totalorder %s13, 0
      %p96 = por %p94, %p95
      %p97 = scmp.ne.s32.totalorder %s89, %s91
      %p98 = scmp.eq.s32.totalorder %s18, 1
      %p99 = por %p97, %p98
      %p100 = scmp.ne.s32.totalorder %s91, %s92
      %p101 = scmp.eq.s32.totalorder %s18, 0
      %p102 = por %p100, %p101
      %p103 = scmp.ne.s32.totalorder %s91, %s92
      %p104 = scmp.eq.s32.totalorder %s19, 1
      %p105 = por %p103, %p104
      %p107 = scmp.ne.s32.totalorder %s92, %s106
      %p108 = scmp.eq.s32.totalorder %s19, 0
      %p109 = por %p107, %p108
      %s110 = ssub.s32 %s13, %s20
      %p111 = scmp.eq.s32.totalorder %s110, 0
      %s113 = sadd.s32 %s112, 1
      %s114 = scalar_select %p111, %s112, %s113
      %p117 = pneg %p111
      %p118 = scmp.eq.s32.totalorder %s13, 1
      %p119 = por %p117, %p118
      %p120 = scmp.ne.s32.totalorder %s112, %s115
      %p121 = scmp.eq.s32.totalorder %s13, 0
      %p122 = por %p120, %p121
      %p123 = scmp.ne.s32.totalorder %s112, %s115
      %p124 = scmp.eq.s32.totalorder %s18, 1
      %p125 = por %p123, %p124
      %p126 = scmp.ne.s32.totalorder %s115, %s116
      %p127 = scmp.eq.s32.totalorder %s18, 0
      %p128 = por %p126, %p127
      %p129 = scmp.ne.s32.totalorder %s115, %s116
      %p130 = scmp.eq.s32.totalorder %s19, 1
      %p131 = por %p129, %p130
      %p133 = scmp.ne.s32.totalorder %s116, %s132
      %p134 = scmp.eq.s32.totalorder %s19, 0
      %p135 = por %p133, %p134
      %p136 = scmp.le.s32.totalorder 1, %s13
      %p137 = scmp.lt.s32.totalorder %s13, 3
      %p138 = pnand %p136, %p137
      %p139 = pneg %p138
      // Predicated region
      $region9: #{tpu_custom_call.1} parent=5 // pred_check
        _
      $region10: #{tpu_custom_call.1} parent=5 // pred_check_branch
        %141 = sbr.rel (%p138) target = $region12
      $region11: #{tpu_custom_call.1} parent=5 // pred_region
        %s142 = ssub.s32 %s13, 1
        // Predicated region
        $region13: #{tpu_custom_call.1} parent=11 // pred_check
          %p143 = pneg %p60
        $region14: #{tpu_custom_call.1} parent=11 // pred_check_branch
          %145 = sbr.rel (%p143) target = $region16
        $region15: #{tpu_custom_call.1} parent=11 // pred_region
          _
        $region16: #{tpu_custom_call.1} parent=11 // pred_fallthru
          _
        // Predicated region
        $region17: #{tpu_custom_call.1} parent=11 // pred_check
          %p146 = pneg %p81
        $region18: #{tpu_custom_call.1} parent=11 // pred_check_branch
          %148 = sbr.rel (%p146) target = $region20
        $region19: #{tpu_custom_call.1} parent=11 // pred_region
          _
        $region20: #{tpu_custom_call.1} parent=11 // pred_fallthru
          _
        // Predicated region
        $region21: #{tpu_custom_call.1} parent=11 // pred_check
          %p149 = pneg %p102
        $region22: #{tpu_custom_call.1} parent=11 // pred_check_branch
          %151 = sbr.rel (%p149) target = $region24
        $region23: #{tpu_custom_call.1} parent=11 // pred_region
          _
        $region24: #{tpu_custom_call.1} parent=11 // pred_fallthru
          _
      $region12: #{tpu_custom_call.1} parent=5 // pred_fallthru
        _
      %p152 = scmp.lt.s32.totalorder %s13, 2
      // Predicated region
      $region25: #{tpu_custom_call.1} parent=5 // pred_check
        %p153 = pneg %p152
      $region26: #{tpu_custom_call.1} parent=5 // pred_check_branch
        %155 = sbr.rel (%p153) target = $region28
      $region27: #{tpu_custom_call.1} parent=5 // pred_region
        // Predicated region
        $region29: #{tpu_custom_call.1} parent=27 // pred_check
          %p156 = pneg %p33
        $region30: #{tpu_custom_call.1} parent=27 // pred_check_branch
          %158 = sbr.rel (%p156) target = $region32
        $region31: #{tpu_custom_call.1} parent=27 // pred_region
          %s159 = smul.u32 13, %s13
          %p160 = scmp.lt.s32.totalorder %s159, 25
          %s161 = scalar_select %p160, %s159, 25
          %s162 = smul.addr %s161, 4
          %s163 = scalar_lea.vmem %s0, %s162
          %s164 = smul.u32 13, %s13
        $region32: #{tpu_custom_call.1} parent=27 // pred_fallthru
          _
      $region28: #{tpu_custom_call.1} parent=5 // pred_fallthru
        _
      %p165 = scmp.le.s32.totalorder 1, %s13
      %p166 = scmp.lt.s32.totalorder %s13, 3
      %p167 = pnand %p165, %p166
      %p168 = pneg %p167
      // Predicated region
      $region33: #{tpu_custom_call.1} parent=5 // pred_check
        _
      $region34: #{tpu_custom_call.1} parent=5 // pred_check_branch
        %170 = sbr.rel (%p167) target = $region36
      $region35: #{tpu_custom_call.1} parent=5 // pred_region
        %s171 = ssub.s32 %s13, 1
        %s172 = smul.u32 13, %s18
        %p173 = scmp.lt.s32.totalorder %s172, 25
        %s174 = scalar_select %p173, %s172, 25
        %s175 = smul.addr %s174, 4
        %s176 = scalar_lea.vmem %s0, %s175
        %p177 = pneg %p39
        %p178 = pneg %p36
        %p179 = pneg %p60
        %p180 = pneg %p57
        %p181 = pneg %p81
        %p182 = pneg %p78
        %p183 = pneg %p102
        %p184 = pneg %p99
        %p185 = pneg %p128
        %p186 = pneg %p125
        %s187 = sand.u32 %s115, 1
        %s188 = scalar_lea.sflag [#allocation3], %s187
        %s189 = sand.u32 %s115, 1
        %s190 = smul.addr %s189, 104
        %s191 = scalar_lea.vmem [#allocation2], %s190
        %s192 = smul.u32 13, %s18
        %p193 = scmp.lt.s32.totalorder %s192, 25
        %s194 = scalar_select %p193, %s192, 25
        %s195 = smul.addr %s194, 4
        %s196 = scalar_lea.vmem %s0, %s195
        %s197 = smul.u32 13, %s18
        %s198 = smul.u32 13, %s18
        %v200 = vld [vmem:[%s196] sm:$0xf]
        %v201 = vld [vmem:[%s196 + $0x4] sm:$0xf]
        %v202 = vld [vmem:[%s196 + $0x8] sm:$0xf]
        %v203 = vld [vmem:[%s196 + $0xc] sm:$0xf]
        %v204 = vld [vmem:[%s196 + $0x10] sm:$0xf]
        %v205 = vld [vmem:[%s196 + $0x14] sm:$0xf]
        %v206 = vld [vmem:[%s196 + $0x18] sm:$0xf]
        %v207 = vld [vmem:[%s196 + $0x1c] sm:$0xf]
        %v208 = vld [vmem:[%s196 + $0x20] sm:$0xf]
        %v209 = vld [vmem:[%s196 + $0x24] sm:$0xf]
        %v210 = vld [vmem:[%s196 + $0x28] sm:$0xf]
        %v211 = vld [vmem:[%s196 + $0x2c] sm:$0xf]
        %v212 = vld [vmem:[%s196 + $0x30] sm:$0xf]
        %v213 = vld [vmem:[%s1] sm:$0xf]
        %v214 = vld [vmem:[%s1 + $0x4] sm:$0xf]
        %v215 = vld [vmem:[%s1 + $0x8] sm:$0xf]
        %v216 = vld [vmem:[%s1 + $0xc] sm:$0xf]
        %v217 = vld [vmem:[%s2] sm:$0xf]
        %v218 = vld [vmem:[%s2 + $0x4] sm:$0xf]
        %v219 = vld [vmem:[%s2 + $0x8] sm:$0xf]
        %v220 = vld [vmem:[%s2 + $0xc] sm:$0xf]
        %v234 = vunpack.c.l.b16 %v200
        %v235 = vunpack.c.l.b16 %v201
        %v236 = vunpack.c.l.b16 %v202
        %v237 = vunpack.c.l.b16 %v203
        %v238 = vunpack.c.l.b16 %v204
        %v239 = vunpack.c.l.b16 %v205
        %v240 = vunpack.c.l.b16 %v206
        %v241 = vunpack.c.l.b16 %v207
        %v242 = vunpack.c.l.b16 %v208
        %v243 = vunpack.c.l.b16 %v209
        %v244 = vunpack.c.l.b16 %v210
        %v245 = vunpack.c.l.b16 %v211
        %v246 = vunpack.c.l.b16 %v212
        %v247 = vpack.c.b16 %v235, %v234
        %v248 = vpack.c.b16 %v237, %v236
        %v249 = vpack.c.b16 %v239, %v238
        %v250 = vpack.c.b16 %v241, %v240
        %v251 = vpack.c.b16 %v243, %v242
        %v252 = vpack.c.b16 %v245, %v244
        %v253 = vpack.c.b16 %v246, %v246
        %v258 = vunpack.c.l.b16 %v217
        %v259 = vunpack.c.l.b16 %v218
        %v260 = vunpack.c.l.b16 %v219
        %v261 = vunpack.c.l.b16 %v220
        %v262 = vpack.c.b16 %v259, %v258
        %v263 = vpack.c.b16 %v261, %v260
        %vm266 = vcmask 261120
        %v268 = vsel %vm266, %v247, 0
        %v271 = vsel %vm266, %v248, 0
        %v274 = vsel %vm266, %v249, 0
        %v277 = vsel %vm266, %v250, 0
        %v280 = vsel %vm266, %v251, 0
        %v283 = vsel %vm266, %v252, 0
        %v286 = vsel %vm266, %v253, 0
        %288 = vmatprep.subr.bf16.mxu0 0
        %289 = vmatpush1.bf16.msra.mxu0 %v262
        %290 = vmatprep.subr.bf16.mxu0 0
        %291 = vmatpush1.bf16.msra.mxu0 %v263
        %292 = vmatprep.subr.bf16.mxu0 0
        %293 = vmatpush1.bf16.msra.mxu0 0
        %294 = vmatprep.subr.bf16.mxu0 0
        %295 = vmatpush1.bf16.msra.mxu0 0
        %296 = vmatprep.subr.bf16.mxu0 0
        %297 = vmatpush1.bf16.msra.mxu0 0
        %298 = vmatprep.subr.bf16.mxu0 0
        %299 = vmatpush1.bf16.msra.mxu0 0
        %300 = vmatprep.subr.bf16.mxu0 0
        %301 = vmatpush1.bf16.msra.mxu0 0
        %302 = vmatprep.subr.bf16.mxu0 0
        %303 = vmatpush1.bf16.msra.mxu0 0
        %304 = vmatprep.subr.bf16.mxu0 0
        %305 = vmatpush1.bf16.msra.mxu0 0
        %306 = vmatprep.subr.bf16.mxu0 0
        %307 = vmatpush1.bf16.msra.mxu0 0
        %308 = vmatprep.subr.bf16.mxu0 0
        %309 = vmatpush1.bf16.msra.mxu0 0
        %310 = vmatprep.subr.bf16.mxu0 0
        %311 = vmatpush1.bf16.msra.mxu0 0
        %312 = vmatprep.subr.bf16.mxu0 0
        %313 = vmatpush1.bf16.msra.mxu0 0
        %314 = vmatprep.subr.bf16.mxu0 0
        %315 = vmatpush1.bf16.msra.mxu0 0
        %316 = vmatprep.subr.bf16.mxu0 0
        %317 = vmatpush1.bf16.msra.mxu0 0
        %318 = vmatprep.subr.bf16.mxu0 0
        %319 = vmatpush1.bf16.msra.mxu0 0
        %320 = vmatprep.mubr.bf16.mxu0 0
        %321 = vmatmul.mubr.bf16.gmra.mrb[0].mxu0 %v268
        %v322 = vpop.f32.mrb[0].mxu0
        %v323 = vadd.f32 0.0, %v322
        %v324 = vpop.f32.mrb[0].mxu0
        %v325 = vpop.f32.mrb[0].mxu0
        %v326 = vadd.f32 0.0, %v325
        %v327 = vpop.f32.mrb[0].mxu0
        %328 = vmatprep.mubr.bf16.mxu0 0
        %329 = vmatmul.mubr.bf16.gmra.mrb[0].mxu0 %v271
        %v330 = vpop.f32.mrb[0].mxu0
        %v331 = vadd.f32 0.0, %v330
        %v332 = vpop.f32.mrb[0].mxu0
        %v333 = vpop.f32.mrb[0].mxu0
        %v334 = vadd.f32 0.0, %v333
        %v335 = vpop.f32.mrb[0].mxu0
        %336 = vmatprep.mubr.bf16.mxu0 0
        %337 = vmatmul.mubr.bf16.gmra.mrb[0].mxu0 %v274
        %v338 = vpop.f32.mrb[0].mxu0
        %v339 = vadd.f32 0.0, %v338
        %v340 = vpop.f32.mrb[0].mxu0
        %v341 = vpop.f32.mrb[0].mxu0
        %v342 = vadd.f32 0.0, %v341
        %v343 = vpop.f32.mrb[0].mxu0
        %344 = vmatprep.mubr.bf16.mxu0 0
        %345 = vmatmul.mubr.bf16.gmra.mrb[0].mxu0 %v277
        %v346 = vpop.f32.mrb[0].mxu0
        %v347 = vadd.f32 0.0, %v346
        %v348 = vpop.f32.mrb[0].mxu0
        %v349 = vpop.f32.mrb[0].mxu0
        %v350 = vadd.f32 0.0, %v349
        %v351 = vpop.f32.mrb[0].mxu0
        %352 = vmatprep.mubr.bf16.mxu0 0
        %353 = vmatmul.mubr.bf16.gmra.mrb[0].mxu0 %v280
        %v354 = vpop.f32.mrb[0].mxu0
        %v355 = vadd.f32 0.0, %v354
        %v356 = vpop.f32.mrb[0].mxu0
        %v357 = vpop.f32.mrb[0].mxu0
        %v358 = vadd.f32 0.0, %v357
        %v359 = vpop.f32.mrb[0].mxu0
        %360 = vmatprep.mubr.bf16.mxu0 0
        %361 = vmatmul.mubr.bf16.gmra.mrb[0].mxu0 %v283
        %v362 = vpop.f32.mrb[0].mxu0
        %v363 = vadd.f32 0.0, %v362
        %v364 = vpop.f32.mrb[0].mxu0
        %v365 = vpop.f32.mrb[0].mxu0
        %v366 = vadd.f32 0.0, %v365
        %v367 = vpop.f32.mrb[0].mxu0
        %368 = vmatprep.mubr.bf16.mxu0 0
        %369 = vmatmul.mubr.bf16.gmra.mrb[0].mxu0 %v286
        %v370 = vpop.f32.mrb[0].mxu0
        %v371 = vadd.f32 0.0, %v370
        %v372 = vpop.f32.mrb[0].mxu0
        %v373 = vpop.f32.mrb[0].mxu0
        %v374 = vpop.f32.mrb[0].mxu0
        %375 = vdwg.mxu0
        %v380 = vunpack.c.l.b16 %v213
        %v381 = vunpack.c.l.b16 %v214
        %v382 = vunpack.c.l.b16 %v215
        %v383 = vunpack.c.l.b16 %v216
        %v384 = vpack.c.b16 %v381, %v380
        %v385 = vpack.c.b16 %v383, %v382
        %388 = vmatprep.subr.bf16.mxu0 0
        %389 = vmatpush1.bf16.msra.mxu0 %v384
        %390 = vmatprep.subr.bf16.mxu0 0
        %391 = vmatpush1.bf16.msra.mxu0 %v385
        %392 = vmatprep.subr.bf16.mxu0 0
        %393 = vmatpush1.bf16.msra.mxu0 0
        %394 = vmatprep.subr.bf16.mxu0 0
        %395 = vmatpush1.bf16.msra.mxu0 0
        %396 = vmatprep.subr.bf16.mxu0 0
        %397 = vmatpush1.bf16.msra.mxu0 0
        %398 = vmatprep.subr.bf16.mxu0 0
        %399 = vmatpush1.bf16.msra.mxu0 0
        %400 = vmatprep.subr.bf16.mxu0 0
        %401 = vmatpush1.bf16.msra.mxu0 0
        %402 = vmatprep.subr.bf16.mxu0 0
        %403 = vmatpush1.bf16.msra.mxu0 0
        %404 = vmatprep.subr.bf16.mxu0 0
        %405 = vmatpush1.bf16.msra.mxu0 0
        %406 = vmatprep.subr.bf16.mxu0 0
        %407 = vmatpush1.bf16.msra.mxu0 0
        %408 = vmatprep.subr.bf16.mxu0 0
        %409 = vmatpush1.bf16.msra.mxu0 0
        %410 = vmatprep.subr.bf16.mxu0 0
        %411 = vmatpush1.bf16.msra.mxu0 0
        %412 = vmatprep.subr.bf16.mxu0 0
        %413 = vmatpush1.bf16.msra.mxu0 0
        %414 = vmatprep.subr.bf16.mxu0 0
        %415 = vmatpush1.bf16.msra.mxu0 0
        %416 = vmatprep.subr.bf16.mxu0 0
        %417 = vmatpush1.bf16.msra.mxu0 0
        %418 = vmatprep.subr.bf16.mxu0 0
        %419 = vmatpush1.bf16.msra.mxu0 0
        %420 = vmatprep.mubr.bf16.mxu0 0
        %421 = vmatmul.mubr.bf16.gmra.mrb[0].mxu0 %v268
        %v422 = vpop.f32.mrb[0].mxu0
        %v423 = vadd.f32 %v323, %v422
        %v424 = vpop.f32.mrb[0].mxu0
        %v425 = vpop.f32.mrb[0].mxu0
        %v426 = vadd.f32 %v326, %v425
        %v427 = vpop.f32.mrb[0].mxu0
        %428 = vmatprep.mubr.bf16.mxu0 0
        %429 = vmatmul.mubr.bf16.gmra.mrb[0].mxu0 %v271
        %v430 = vpop.f32.mrb[0].mxu0
        %v431 = vadd.f32 %v331, %v430
        %v432 = vpop.f32.mrb[0].mxu0
        %v433 = vpop.f32.mrb[0].mxu0
        %v434 = vadd.f32 %v334, %v433
        %v435 = vpop.f32.mrb[0].mxu0
        %436 = vmatprep.mubr.bf16.mxu0 0
        %437 = vmatmul.mubr.bf16.gmra.mrb[0].mxu0 %v274
        %v438 = vpop.f32.mrb[0].mxu0
        %v439 = vadd.f32 %v339, %v438
        %v440 = vpop.f32.mrb[0].mxu0
        %v441 = vpop.f32.mrb[0].mxu0
        %v442 = vadd.f32 %v342, %v441
        %v443 = vpop.f32.mrb[0].mxu0
        %444 = vmatprep.mubr.bf16.mxu0 0
        %445 = vmatmul.mubr.bf16.gmra.mrb[0].mxu0 %v277
        %v446 = vpop.f32.mrb[0].mxu0
        %v447 = vadd.f32 %v347, %v446
        %v448 = vpop.f32.mrb[0].mxu0
        %v449 = vpop.f32.mrb[0].mxu0
        %v450 = vadd.f32 %v350, %v449
        %v451 = vpop.f32.mrb[0].mxu0
        %452 = vmatprep.mubr.bf16.mxu0 0
        %453 = vmatmul.mubr.bf16.gmra.mrb[0].mxu0 %v280
        %v454 = vpop.f32.mrb[0].mxu0
        %v455 = vadd.f32 %v355, %v454
        %v456 = vpop.f32.mrb[0].mxu0
        %v457 = vpop.f32.mrb[0].mxu0
        %v458 = vadd.f32 %v358, %v457
        %v459 = vpop.f32.mrb[0].mxu0
        %460 = vmatprep.mubr.bf16.mxu0 0
        %461 = vmatmul.mubr.bf16.gmra.mrb[0].mxu0 %v283
        %v462 = vpop.f32.mrb[0].mxu0
        %v463 = vadd.f32 %v363, %v462
        %v464 = vpop.f32.mrb[0].mxu0
        %v465 = vpop.f32.mrb[0].mxu0
        %v466 = vadd.f32 %v366, %v465
        %v467 = vpop.f32.mrb[0].mxu0
        %468 = vmatprep.mubr.bf16.mxu0 0
        %469 = vmatmul.mubr.bf16.gmra.mrb[0].mxu0 %v286
        %v470 = vpop.f32.mrb[0].mxu0
        %v471 = vadd.f32 %v371, %v470
        %v472 = vpop.f32.mrb[0].mxu0
        %v473 = vpop.f32.mrb[0].mxu0
        %v474 = vpop.f32.mrb[0].mxu0
        %475 = vdwg.mxu0
        %v476 = vld [vmem:[%s3] sm:$0x1]
        %v478 = vlaneseq
        %v479 = vshrl.u32 %v478, 7
        %v480 = vsub.s32 0, %v479
        %v481 = vrot.slane %v476, %v480
        %v483 = vadd.f32 %v423, %v481
        %v484 = vadd.f32 %v426, %v481
        %v485 = vadd.f32 %v431, %v481
        %v486 = vadd.f32 %v434, %v481
        %v487 = vadd.f32 %v439, %v481
        %v488 = vadd.f32 %v442, %v481
        %v489 = vadd.f32 %v447, %v481
        %v490 = vadd.f32 %v450, %v481
        %v491 = vadd.f32 %v455, %v481
        %v492 = vadd.f32 %v458, %v481
        %v493 = vadd.f32 %v463, %v481
        %v494 = vadd.f32 %v466, %v481
        %v495 = vadd.f32 %v471, %v481
        %496 = vmax.xlane.f32.xlu0 %v483
        %v497 = vpop.xlane.xlu0 %496
        %498 = vmax.xlane.f32.xlu0 %v484
        %v499 = vpop.xlane.xlu0 %498
        %500 = vmax.xlane.f32.xlu0 %v485
        %v501 = vpop.xlane.xlu0 %500
        %502 = vmax.xlane.f32.xlu0 %v486
        %v503 = vpop.xlane.xlu0 %502
        %504 = vmax.xlane.f32.xlu0 %v487
        %v505 = vpop.xlane.xlu0 %504
        %506 = vmax.xlane.f32.xlu0 %v488
        %v507 = vpop.xlane.xlu0 %506
        %508 = vmax.xlane.f32.xlu0 %v489
        %v509 = vpop.xlane.xlu0 %508
        %510 = vmax.xlane.f32.xlu0 %v490
        %v511 = vpop.xlane.xlu0 %510
        %512 = vmax.xlane.f32.xlu0 %v491
        %v513 = vpop.xlane.xlu0 %512
        %514 = vmax.xlane.f32.xlu0 %v492
        %v515 = vpop.xlane.xlu0 %514
        %516 = vmax.xlane.f32.xlu0 %v493
        %v517 = vpop.xlane.xlu0 %516
        %518 = vmax.xlane.f32.xlu0 %v494
        %v519 = vpop.xlane.xlu0 %518
        %520 = vmax.xlane.f32.xlu0 %v495
        %v521 = vpop.xlane.xlu0 %520
        %v522 = vsub.f32 %v483, %v497
        %v523 = vsub.f32 %v484, %v499
        %v524 = vsub.f32 %v485, %v501
        %v525 = vsub.f32 %v486, %v503
        %v526 = vsub.f32 %v487, %v505
        %v527 = vsub.f32 %v488, %v507
        %v528 = vsub.f32 %v489, %v509
        %v529 = vsub.f32 %v490, %v511
        %v530 = vsub.f32 %v491, %v513
        %v531 = vsub.f32 %v492, %v515
        %v532 = vsub.f32 %v493, %v517
        %v533 = vsub.f32 %v494, %v519
        %v534 = vsub.f32 %v495, %v521
        %v535 = vmul.f32 %v522, 1.442695
        %v536 = vpow.pop %v535
        %v537 = vmul.f32 %v523, 1.442695
        %v538 = vpow.pop %v537
        %v539 = vmul.f32 %v524, 1.442695
        %v540 = vpow.pop %v539
        %v541 = vmul.f32 %v525, 1.442695
        %v542 = vpow.pop %v541
        %v543 = vmul.f32 %v526, 1.442695
        %v544 = vpow.pop %v543
        %v545 = vmul.f32 %v527, 1.442695
        %v546 = vpow.pop %v545
        %v547 = vmul.f32 %v528, 1.442695
        %v548 = vpow.pop %v547
        %v549 = vmul.f32 %v529, 1.442695
        %v550 = vpow.pop %v549
        %v551 = vmul.f32 %v530, 1.442695
        %v552 = vpow.pop %v551
        %v553 = vmul.f32 %v531, 1.442695
        %v554 = vpow.pop %v553
        %v555 = vmul.f32 %v532, 1.442695
        %v556 = vpow.pop %v555
        %v557 = vmul.f32 %v533, 1.442695
        %v558 = vpow.pop %v557
        %v559 = vmul.f32 %v534, 1.442695
        %v560 = vpow.pop %v559
        %561 = vadd.xlane.f32.xlu0 %v536
        %v562 = vpop.xlane.xlu0 %561
        %563 = vadd.xlane.f32.xlu0 %v538
        %v564 = vpop.xlane.xlu0 %563
        %565 = vadd.xlane.f32.xlu0 %v540
        %v566 = vpop.xlane.xlu0 %565
        %567 = vadd.xlane.f32.xlu0 %v542
        %v568 = vpop.xlane.xlu0 %567
        %569 = vadd.xlane.f32.xlu0 %v544
        %v570 = vpop.xlane.xlu0 %569
        %571 = vadd.xlane.f32.xlu0 %v546
        %v572 = vpop.xlane.xlu0 %571
        %573 = vadd.xlane.f32.xlu0 %v548
        %v574 = vpop.xlane.xlu0 %573
        %575 = vadd.xlane.f32.xlu0 %v550
        %v576 = vpop.xlane.xlu0 %575
        %577 = vadd.xlane.f32.xlu0 %v552
        %v578 = vpop.xlane.xlu0 %577
        %579 = vadd.xlane.f32.xlu0 %v554
        %v580 = vpop.xlane.xlu0 %579
        %581 = vadd.xlane.f32.xlu0 %v556
        %v582 = vpop.xlane.xlu0 %581
        %583 = vadd.xlane.f32.xlu0 %v558
        %v584 = vpop.xlane.xlu0 %583
        %585 = vadd.xlane.f32.xlu0 %v560
        %v586 = vpop.xlane.xlu0 %585
        %v587 = vrcp.pop %v562
        %v588 = vmul.f32 1.0, %v587
        %v589 = vrcp.pop %v564
        %v590 = vmul.f32 1.0, %v589
        %v591 = vrcp.pop %v566
        %v592 = vmul.f32 1.0, %v591
        %v593 = vrcp.pop %v568
        %v594 = vmul.f32 1.0, %v593
        %v595 = vrcp.pop %v570
        %v596 = vmul.f32 1.0, %v595
        %v597 = vrcp.pop %v572
        %v598 = vmul.f32 1.0, %v597
        %v599 = vrcp.pop %v574
        %v600 = vmul.f32 1.0, %v599
        %v601 = vrcp.pop %v576
        %v602 = vmul.f32 1.0, %v601
        %v603 = vrcp.pop %v578
        %v604 = vmul.f32 1.0, %v603
        %v605 = vrcp.pop %v580
        %v606 = vmul.f32 1.0, %v605
        %v607 = vrcp.pop %v582
        %v608 = vmul.f32 1.0, %v607
        %v609 = vrcp.pop %v584
        %v610 = vmul.f32 1.0, %v609
        %v611 = vrcp.pop %v586
        %v612 = vmul.f32 1.0, %v611
        %v613 = vmul.f32 %v536, %v588
        %v614 = vmul.f32 %v538, %v590
        %v615 = vmul.f32 %v540, %v592
        %v616 = vmul.f32 %v542, %v594
        %v617 = vmul.f32 %v544, %v596
        %v618 = vmul.f32 %v546, %v598
        %v619 = vmul.f32 %v548, %v600
        %v620 = vmul.f32 %v550, %v602
        %v621 = vmul.f32 %v552, %v604
        %v622 = vmul.f32 %v554, %v606
        %v623 = vmul.f32 %v556, %v608
        %v624 = vmul.f32 %v558, %v610
        %v625 = vmul.f32 %v560, %v612
        %626 = vst [vmem:[%s191] sm:$0xff] %v613
        %627 = vst [vmem:[%s191 + $0x8] sm:$0xff] %v614
        %628 = vst [vmem:[%s191 + $0x10] sm:$0xff] %v615
        %629 = vst [vmem:[%s191 + $0x18] sm:$0xff] %v616
        %630 = vst [vmem:[%s191 + $0x20] sm:$0xff] %v617
        %631 = vst [vmem:[%s191 + $0x28] sm:$0xff] %v618
        %632 = vst [vmem:[%s191 + $0x30] sm:$0xff] %v619
        %633 = vst [vmem:[%s191 + $0x38] sm:$0xff] %v620
        %634 = vst [vmem:[%s191 + $0x40] sm:$0xff] %v621
        %635 = vst [vmem:[%s191 + $0x48] sm:$0xff] %v622
        %636 = vst [vmem:[%s191 + $0x50] sm:$0xff] %v623
        %637 = vst [vmem:[%s191 + $0x58] sm:$0xff] %v624
        %638 = vst [vmem:[%s191 + $0x60] sm:$0xff] %v625
        %s639 = sand.u32 %s115, 1
        %s640 = scalar_lea.sflag [#allocation3], %s639
        %s641 = sand.u32 %s115, 1
        %s642 = smul.addr %s641, 104
        %s643 = scalar_lea.vmem [#allocation2], %s642
        // Predicated region
        $region37: #{tpu_custom_call.1} parent=35 // pred_check
          %p644 = pneg %p125
        $region38: #{tpu_custom_call.1} parent=35 // pred_check_branch
          %646 = sbr.rel (%p644) target = $region40
        $region39: #{tpu_custom_call.1} parent=35 // pred_region
          %s647 = smul.u32 13, %s18
          %s649 = ssub.s32 1664, 1664
          %650 = vsyncadd %s640, %s649
          %s651 = smul.addr %s647, 128
          %s652 = scalar_lea.hbm %s4, %s651
          %s653 = sshll.u32 %s643, 4
          %s654 = int_to_ptr.vmem [resolvable:$true] %s653
          %659 = dma.vmem_to_hbm [thread:$0]  %s654, 1664, %s652, %s640, 128, 128, 8
        $region40: #{tpu_custom_call.1} parent=35 // pred_fallthru
          _
      $region36: #{tpu_custom_call.1} parent=5 // pred_fallthru
        _
      %p660 = scmp.le.s32.totalorder 2, %s13
      // Predicated region
      $region41: #{tpu_custom_call.1} parent=5 // pred_check
        %p661 = pneg %p660
      $region42: #{tpu_custom_call.1} parent=5 // pred_check_branch
        %663 = sbr.rel (%p661) target = $region44
      $region43: #{tpu_custom_call.1} parent=5 // pred_region
        %s664 = ssub.s32 %s13, 2
        // Predicated region
        $region45: #{tpu_custom_call.1} parent=43 // pred_check
          %p665 = pneg %p131
        $region46: #{tpu_custom_call.1} parent=43 // pred_check_branch
          %667 = sbr.rel (%p665) target = $region48
        $region47: #{tpu_custom_call.1} parent=43 // pred_region
          %s668 = sand.u32 %s116, 1
          %s669 = scalar_lea.sflag [#allocation3], %s668
          %s670 = sand.u32 %s116, 1
          %s671 = smul.addr %s670, 104
          %s672 = scalar_lea.vmem [#allocation2], %s671
          %673 = dma.done %s669, 1664
        $region48: #{tpu_custom_call.1} parent=43 // pred_fallthru
          _
      $region44: #{tpu_custom_call.1} parent=5 // pred_fallthru
        _
    $region6: #{tpu_custom_call.1} parent=1 // loop_footer
      %s17 = sadd.s32 1, %s13
    $region7: #{tpu_custom_call.1} parent=1 // loop_footer_branch
      %12 = sbr.rel target = $region3
    $region8: #{tpu_custom_call.1} parent=1 // loop_exit
      _
    %674 = vsyncpa [#allocation3], 1
    %s675 = scalar_lea.sflag [#allocation3], 1
    %676 = vsyncpa %s675, 1

</llo_original>
